<compile_context>
chip_gen: v7x
topology: tpu7x:2x2x1
jax: 0.10.0
libtpu: 0.0.40
codegen_flags: <defaults>
</compile_context>

<pallas_src>
from functools import partial

import jax
import jax.numpy as jnp
import numpy as np
from jax import lax
from jax.experimental import pallas as pl
from jax.experimental.pallas import tpu as pltpu

RATIO = 8     # module-level `ratio` in the reference code
KSIZE = 9
STRIDE = 2

_VMEM_BUDGET_BYTES = 24 * 1024 * 1024   # conservative across v5e/v6e/v7x


def primary_caps_kernel(p_ref, w_ref, o_ref, *, nb, s):
    # p_ref: (G, M, K) bf16 im2col patches of Nb batch elements (M = Nb*S)
    # w_ref: (G, U, K) bf16 per-group weights, K-major (lane dim = K), resident
    # o_ref: (G, U, M) f32 squashed capsule outputs (batch/spatial on lanes, dense)
    p = p_ref[...]
    w = w_ref[...]
    m = nb * s

    # grouped conv == per-group matmul (batched over G) on the MXU, f32 accumulation
    u = lax.dot_general(
        w, p,
        dimension_numbers=(((2,), (2,)), ((0,), (0,))),
        preferred_element_type=jnp.float32)                       # (G, U, M)

    # ---- squash over the full capsule vector (all groups g, all spatial s) per (n, u') ----
    gsum = jnp.sum(u * u, axis=0)                                 # (U, M)

    # segment-indicator matrices: lanes [n*S, (n+1)*S) belong to block-local batch n.
    # Built with 2-D iota + compares (no reshape of the lane dim, no integer division).
    row = lax.broadcasted_iota(jnp.int32, (m, nb), 0)
    col = lax.broadcasted_iota(jnp.int32, (m, nb), 1)
    seg = ((row >= col * s) & (row < (col + 1) * s)).astype(jnp.float32)     # (M, Nb)
    rowT = lax.broadcasted_iota(jnp.int32, (nb, m), 1)
    colT = lax.broadcasted_iota(jnp.int32, (nb, m), 0)
    segT = ((rowT >= colT * s) & (rowT < (colT + 1) * s)).astype(jnp.float32)  # (Nb, M)

    mag_sq = jnp.dot(gsum, seg, preferred_element_type=jnp.float32)          # (U, Nb)
    # mag_sq/((1+mag_sq)*mag) == sqrt(mag_sq)/(1+mag_sq): no NaN for zero capsules.
    scale_un = jnp.sqrt(mag_sq) / (1.0 + mag_sq)                             # (U, Nb)
    scale = jnp.dot(scale_un, segT, preferred_element_type=jnp.float32)      # (U, M)

    # single dense full-block store (lane dim = M)
    o_ref[...] = (u * scale[None, :, :]).astype(o_ref.dtype)


def _choose_block_batch(n, g, u, s, k, vmem_budget_bytes):
    # Resident bytes per blocked batch element: double-buffered bf16 patch block +
    # double-buffered f32 out block (weights are small and counted separately).
    per_n = 2 * (g * s * k * 2) + 2 * (g * u * s * 4)
    nb = max(1, min(n, vmem_budget_bytes // max(per_n, 1)))
    if n >= 2:
        nb = min(nb, n // 2)      # keep grid length >= 2 so both v7x TensorCores get work
    nb = int(max(nb, 1))
    while n % nb:
        nb -= 1
    return nb


def _build_patches(x, groups, nb, ho, wo):
    # x: (N, C, H, W) f32, C == groups * RATIO.
    # Returns (N//nb, G, nb*Ho*Wo, RATIO*81) bf16 patches, K ordered (r, ky, kx),
    # M ordered (block-local n, i, j) -- built DIRECTLY in the final layout so the
    # inflated array is written exactly once (no post-hoc transpose pass over it).
    N, C, H, W = x.shape
    NB = N // nb
    xt = (x.astype(jnp.bfloat16)
           .reshape(NB, nb, groups, RATIO, H, W)
           .transpose(0, 2, 1, 4, 5, 3))            # (NB, G, nb, H, W, R) -- cheap, x-sized
    cols = []
    for ky in range(KSIZE):
        for kx in range(KSIZE):
            cols.append(xt[:, :, :,
                           ky:ky + STRIDE * ho:STRIDE,
                           kx:kx + STRIDE * wo:STRIDE, :])         # (NB, G, nb, Ho, Wo, R)
    p = jnp.stack(cols, axis=-1)                    # (NB, G, nb, Ho, Wo, R, 81)
    return p.reshape(NB, groups, nb * ho * wo, RATIO * KSIZE * KSIZE)


@jax.jit
def primary_caps_forward(x, weights):
    # x: (N, C, H, W) NCHW f32;  weights: (U, G, ratio, 9, 9), G = C // ratio, no bias.
    N, C, H, W = x.shape
    U, G, r, k1, k2 = weights.shape
    assert r == RATIO and k1 == KSIZE and k2 == KSIZE
    assert C % RATIO == 0 and G == C // RATIO

    Ho = (H - KSIZE) // STRIDE + 1
    Wo = (W - KSIZE) // STRIDE + 1
    S = Ho * Wo
    K = RATIO * KSIZE * KSIZE

    Nb = _choose_block_batch(N, G, U, S, K, _VMEM_BUDGET_BYTES)
    NB = N // Nb
    M = Nb * S

    patches = _build_patches(x, G, Nb, Ho, Wo)                     # (NB, G, M, K) bf16
    # K-major resident weights: lane dim = K (dense vregs), not U.
    w_r = (weights.transpose(1, 0, 2, 3, 4)
                  .reshape(G, U, K)
                  .astype(jnp.bfloat16))                           # (G, U, K)

    p_blk = G * M * K * 2
    w_bytes = G * U * K * 2
    o_blk = G * U * M * 4
    vmem_need = 2 * (p_blk + o_blk + w_bytes)
    vmem_limit = int(min(max(2 * vmem_need, 32 << 20), 64 << 20))  # explicit, v7x-safe

    cost = pl.CostEstimate(
        flops=2 * N * G * U * S * K,
        transcendentals=N * U,
        bytes_accessed=NB * (p_blk + o_blk) + w_bytes)

    out_blk = pl.pallas_call(
        partial(primary_caps_kernel, nb=Nb, s=S),
        out_shape=jax.ShapeDtypeStruct((NB, G, U, M), jnp.float32),
        grid=(NB,),
        in_specs=[
            # leading block-batch dim is squeezed out of the kernel ref
            pl.BlockSpec((None, G, M, K), lambda i: (i, 0, 0, 0)),
            pl.BlockSpec((G, U, K), lambda i: (0, 0, 0)),          # constant -> resident
        ],
        out_specs=pl.BlockSpec((None, G, U, M), lambda i: (i, 0, 0, 0)),
        compiler_params=pltpu.CompilerParams(
            dimension_semantics=("parallel",),                     # shards over v7x's 2 TCs
            vmem_limit_bytes=vmem_limit),
        cost_estimate=cost,
    )(patches, w_r)

    # Assemble the PyTorch (N, U, G*Ho*Wo) capsule layout.  This transpose touches only
    # the small post-conv output array (negligible HBM traffic vs the patches).
    out = (out_blk.reshape(NB, G, U, Nb, S)
                  .transpose(0, 3, 2, 1, 4)
                  .reshape(N, U, G * S))
    return out


def reference_forward(x, weights):
    # Pure-JAX f32 reference reproducing the PyTorch module exactly.
    N = x.shape[0]
    U, G = weights.shape[0], weights.shape[1]
    outs = []
    for u in range(U):
        o = lax.conv_general_dilated(
            x, weights[u], window_strides=(STRIDE, STRIDE), padding='VALID',
            dimension_numbers=('NCHW', 'OIHW', 'NCHW'), feature_group_count=G,
            precision=lax.Precision.HIGHEST)
        outs.append(o)
    s = jnp.stack(outs, axis=1).reshape(N, U, -1)
    mag_sq = jnp.sum(s ** 2, axis=2, keepdims=True)
    mag = jnp.sqrt(mag_sq)
    return mag_sq / (1.0 + mag_sq) * (s / mag)


if __name__ == "__main__":
    key = jax.random.PRNGKey(0)
    kx, kw = jax.random.split(key)

    # small shapes: batch=4 (so Nb=2 blocking + a 2-step grid is exercised),
    # in_channels=16 (-> Caps_out = 2), spatial 16x16, caps_units=4
    N, C, H, W = 4, 16, 16, 16
    caps_units = 4
    G = C // RATIO

    x = jax.random.normal(kx, (N, C, H, W), dtype=jnp.float32)

    # deterministic synthetic conv weights: (caps_units, Caps_out, ratio, 9, 9), no bias
    fan_in = RATIO * KSIZE * KSIZE
    weights = jax.random.uniform(
        kw, (caps_units, G, RATIO, KSIZE, KSIZE),
        dtype=jnp.float32, minval=-1.0, maxval=1.0) / jnp.sqrt(fan_in)

    out = primary_caps_forward(x, weights)
    out = jax.block_until_ready(out)

    Ho = (H - KSIZE) // STRIDE + 1
    assert out.shape == (N, caps_units, G * Ho * Ho)

    # f32 reference; the kernel uses bf16 MXU operands (f32 accumulation), so the
    # tolerance reflects bf16 input rounding over the K=648 contraction.
    ref = reference_forward(x, weights)
    np.testing.assert_allclose(np.asarray(out), np.asarray(ref), atol=1e-2, rtol=1e-2)

    print("KERNEL_OK")
</pallas_src>

<mosaic_0001>
module attributes {stable_mosaic.version = 11 : i64} {
  func.func @primary_caps_kernel(%arg0: i32, %arg1: memref<1x2x32x648xbf16, #tpu.memory_space<vmem>>, %arg2: memref<2x4x648xbf16, #tpu.memory_space<vmem>>, %arg3: memref<1x2x4x32xf32, #tpu.memory_space<vmem>>) attributes {dimension_semantics = [#tpu.dimension_semantics<parallel>], iteration_bounds = array<i64: 2>, scalar_prefetch = 0 : i64, scratch_operands = 0 : i64, tpu.core_type = #tpu.core_type<tc>, window_params = [{transform_indices = @transform_0, window_bounds = array<i64: 1, 2, 32, 648>}, {pipeline_mode = #tpu.pipeline_mode<synchronous>, transform_indices = @transform_1, window_bounds = array<i64: 2, 4, 648>}, {transform_indices = @transform_2, window_bounds = array<i64: 1, 2, 4, 32>}]} {
    %c0 = arith.constant 0 : index
    %c0_0 = arith.constant 0 : index
    %c0_1 = arith.constant 0 : index
    %c0_2 = arith.constant 0 : index
    %0 = vector.load %arg1[%c0, %c0_0, %c0_1, %c0_2] : memref<1x2x32x648xbf16, #tpu.memory_space<vmem>>, vector<1x2x32x648xbf16>
    %1 = vector.shape_cast %0 : vector<1x2x32x648xbf16> to vector<2x32x648xbf16>
    %c0_3 = arith.constant 0 : index
    %c0_4 = arith.constant 0 : index
    %c0_5 = arith.constant 0 : index
    %2 = vector.load %arg2[%c0_3, %c0_4, %c0_5] : memref<2x4x648xbf16, #tpu.memory_space<vmem>>, vector<2x4x648xbf16>
    %cst = arith.constant dense<0.000000e+00> : vector<2x4x32xf32>
    %3 = tpu.matmul %2, %1, %cst {dimension_numbers = #tpu.dot_dimension_numbers<[2], [2], [1], [1], [0, 0, 0, 1, 1, 1], [0], [0]>} : vector<2x4x648xbf16>, vector<2x32x648xbf16>, vector<2x4x32xf32> -> vector<2x4x32xf32>
    %4 = arith.mulf %3, %3 : vector<2x4x32xf32>
    %cst_6 = arith.constant dense<0.000000e+00> : vector<4x32xf32>
    %5 = vector.multi_reduction <add>, %4, %cst_6 [0] : vector<2x4x32xf32> to vector<4x32xf32>
    %6 = tpu.iota {dimensions = array<i32: 0>} : vector<32x2xi32>
    %7 = tpu.iota {dimensions = array<i32: 1>} : vector<32x2xi32>
    %c16_i32 = arith.constant 16 : i32
    %8 = vector.broadcast %c16_i32 : i32 to vector<32x2xi32>
    %9 = arith.muli %7, %8 : vector<32x2xi32>
    %10 = arith.cmpi sge, %6, %9 : vector<32x2xi32>
    %c1_i32 = arith.constant 1 : i32
    %11 = vector.broadcast %c1_i32 : i32 to vector<32x2xi32>
    %12 = arith.addi %7, %11 : vector<32x2xi32>
    %c16_i32_7 = arith.constant 16 : i32
    %13 = vector.broadcast %c16_i32_7 : i32 to vector<32x2xi32>
    %14 = arith.muli %12, %13 : vector<32x2xi32>
    %15 = arith.cmpi slt, %6, %14 : vector<32x2xi32>
    %16 = arith.andi %10, %15 : vector<32x2xi1>
    %17 = arith.extui %16 : vector<32x2xi1> to vector<32x2xi32>
    %18 = arith.sitofp %17 : vector<32x2xi32> to vector<32x2xf32>
    %19 = tpu.iota {dimensions = array<i32: 1>} : vector<2x32xi32>
    %20 = tpu.iota {dimensions = array<i32: 0>} : vector<2x32xi32>
    %c16_i32_8 = arith.constant 16 : i32
    %21 = vector.broadcast %c16_i32_8 : i32 to vector<2x32xi32>
    %22 = arith.muli %20, %21 : vector<2x32xi32>
    %23 = arith.cmpi sge, %19, %22 : vector<2x32xi32>
    %c1_i32_9 = arith.constant 1 : i32
    %24 = vector.broadcast %c1_i32_9 : i32 to vector<2x32xi32>
    %25 = arith.addi %20, %24 : vector<2x32xi32>
    %c16_i32_10 = arith.constant 16 : i32
    %26 = vector.broadcast %c16_i32_10 : i32 to vector<2x32xi32>
    %27 = arith.muli %25, %26 : vector<2x32xi32>
    %28 = arith.cmpi slt, %19, %27 : vector<2x32xi32>
    %29 = arith.andi %23, %28 : vector<2x32xi1>
    %30 = arith.extui %29 : vector<2x32xi1> to vector<2x32xi32>
    %31 = arith.sitofp %30 : vector<2x32xi32> to vector<2x32xf32>
    %cst_11 = arith.constant dense<0.000000e+00> : vector<4x2xf32>
    %32 = tpu.matmul %5, %18, %cst_11 {dimension_numbers = #tpu.dot_dimension_numbers<[1], [0], [0], [1], [0, 0, 1, 1], [], []>} : vector<4x32xf32>, vector<32x2xf32>, vector<4x2xf32> -> vector<4x2xf32>
    %33 = math.sqrt %32 : vector<4x2xf32>
    %cst_12 = arith.constant 1.000000e+00 : f32
    %34 = vector.broadcast %cst_12 : f32 to vector<4x2xf32>
    %35 = arith.addf %34, %32 : vector<4x2xf32>
    %36 = arith.divf %33, %35 : vector<4x2xf32>
    %cst_13 = arith.constant dense<0.000000e+00> : vector<4x32xf32>
    %37 = tpu.matmul %36, %31, %cst_13 {dimension_numbers = #tpu.dot_dimension_numbers<[1], [0], [0], [1], [0, 0, 1, 1], [], []>} : vector<4x2xf32>, vector<2x32xf32>, vector<4x32xf32> -> vector<4x32xf32>
    %38 = vector.shape_cast %37 : vector<4x32xf32> to vector<1x4x32xf32>
    %39 = vector.broadcast %38 : vector<1x4x32xf32> to vector<2x4x32xf32>
    %40 = arith.mulf %3, %39 : vector<2x4x32xf32>
    %c0_14 = arith.constant 0 : index
    %c0_15 = arith.constant 0 : index
    %c0_16 = arith.constant 0 : index
    %c0_17 = arith.constant 0 : index
    %41 = vector.load %arg3[%c0_14, %c0_15, %c0_16, %c0_17] : memref<1x2x4x32xf32, #tpu.memory_space<vmem>>, vector<1x2x4x32xf32>
    %42 = vector.shape_cast %41 : vector<1x2x4x32xf32> to vector<2x4x32xf32>
    %43 = vector.shape_cast %40 : vector<2x4x32xf32> to vector<1x2x4x32xf32>
    tpu.vector_store %arg3[%c0_14, %c0_15, %c0_16, %c0_17], %43 {strides = array<i32>} : memref<1x2x4x32xf32, #tpu.memory_space<vmem>>, vector<1x2x4x32xf32>,
    return
  }
  func.func @transform_0(%arg0: i32) -> (i32, i32, i32, i32) {
    %c0_i32 = arith.constant 0 : i32
    %c0_i32_0 = arith.constant 0 : i32
    %c0_i32_1 = arith.constant 0 : i32
    %c0_i32_2 = arith.constant 0 : i32
    return %arg0, %c0_i32, %c0_i32_0, %c0_i32_1 : i32, i32, i32, i32
  }
  func.func @transform_1(%arg0: i32) -> (i32, i32, i32) {
    %c0_i32 = arith.constant 0 : i32
    %c0_i32_0 = arith.constant 0 : i32
    %c0_i32_1 = arith.constant 0 : i32
    %c0_i32_2 = arith.constant 0 : i32
    return %c0_i32, %c0_i32_0, %c0_i32_1 : i32, i32, i32
  }
  func.func @transform_2(%arg0: i32) -> (i32, i32, i32, i32) {
    %c0_i32 = arith.constant 0 : i32
    %c0_i32_0 = arith.constant 0 : i32
    %c0_i32_1 = arith.constant 0 : i32
    %c0_i32_2 = arith.constant 0 : i32
    return %arg0, %c0_i32, %c0_i32_0, %c0_i32_1 : i32, i32, i32, i32
  }
}

</mosaic_0001>

<llo_original>
// kernel: primary_caps_forward.1
$region0: #{primary_caps_forward.1}
  #allocation0 [shape = 'u32[]', space=smem, size = 0x4, offset = 0x4, fixed_abs, tag = 'smem constant byte address 0x4 - core index']
  #allocation1 [shape = 'u32[144,128]{1,0:T(1,128)}', space=vmem, size = 0x12000, scoped, tag = 'internal scratch']
  %s0 = inlined_call_operand.vmem [shape: bf16[2,2,32,648], index: 0, kind: input, shape index: {}]
  %s1 = inlined_call_operand.vmem [shape: bf16[2,4,648], index: 1, kind: input, shape index: {}]
  %s2 = inlined_call_operand.vmem [shape: f32[2,2,4,32], index: 2, kind: output, shape index: {}]
  %s3 = sld [smem:[#allocation0]]
  $region41: #{primary_caps_forward.1} parent=0
    _
  %s5 = ssub.s32 1, %s3
  %s6 = scalar_select 0, %s5, %s3
  loop: start=0, step=1, limit=4
  $region2: #{primary_caps_forward.1} parent=0 // loop_pre_header
    _
  $region3: #{primary_caps_forward.1} parent=0 // loop_header
    %s8 = sphi 0, %s12
    %p9 = scmp.ge.s32.totalorder %s8, 4
    %s18 = sphi 0, %s20
    %s21 = sphi 0, %s18
    %s22 = sphi 0, %s21
    %s38 = sphi 0, %s22
    %s42 = sphi 0, %s42
    %s44 = sphi 0, %s42
    %s45 = sphi 0, %s44
    %s59 = sphi 0, %s45
    %s65 = sphi 0, %s67
    %s68 = sphi 0, %s65
    %s69 = sphi 0, %s68
    %s85 = sphi 0, %s69
  $region4: #{primary_caps_forward.1} parent=0 // loop_header_branch
    %11 = sbr.rel (%p9) target = $region8
  $region5: #{primary_caps_forward.1} parent=0 // loop_body
    %s13 = ssub.s32 %s8, 1
    %s14 = ssub.s32 %s8, 2
    %s15 = sadd.s32 %s8, 1
    %s16 = ssub.s32 %s8, %s15
    %p17 = scmp.eq.s32.totalorder %s16, 0
    %s19 = sadd.s32 %s18, 1
    %s20 = scalar_select %p17, %s18, %s19
    %p23 = pneg %p17
    %p24 = scmp.eq.s32.totalorder %s8, 1
    %p25 = por %p23, %p24
    %p26 = scmp.ne.s32.totalorder %s18, %s21
    %p27 = scmp.eq.s32.totalorder %s8, 0
    %p28 = por %p26, %p27
    %p29 = scmp.ne.s32.totalorder %s18, %s21
    %p30 = scmp.eq.s32.totalorder %s13, 1
    %p31 = por %p29, %p30
    %p32 = scmp.ne.s32.totalorder %s21, %s22
    %p33 = scmp.eq.s32.totalorder %s13, 0
    %p34 = por %p32, %p33
    %p35 = scmp.ne.s32.totalorder %s21, %s22
    %p36 = scmp.eq.s32.totalorder %s14, 1
    %p37 = por %p35, %p36
    %p39 = scmp.ne.s32.totalorder %s22, %s38
    %p40 = scmp.eq.s32.totalorder %s14, 0
    %p41 = por %p39, %p40
    %s43 = sadd.s32 %s42, 1
    %p46 = scmp.eq.s32.totalorder %s8, 1
    %p47 = scmp.ne.s32.totalorder %s42, %s44
    %p48 = scmp.eq.s32.totalorder %s8, 0
    %p49 = por %p47, %p48
    %p50 = scmp.ne.s32.totalorder %s42, %s44
    %p51 = scmp.eq.s32.totalorder %s13, 1
    %p52 = por %p50, %p51
    %p53 = scmp.ne.s32.totalorder %s44, %s45
    %p54 = scmp.eq.s32.totalorder %s13, 0
    %p55 = por %p53, %p54
    %p56 = scmp.ne.s32.totalorder %s44, %s45
    %p57 = scmp.eq.s32.totalorder %s14, 1
    %p58 = por %p56, %p57
    %p60 = scmp.ne.s32.totalorder %s45, %s59
    %p61 = scmp.eq.s32.totalorder %s14, 0
    %p62 = por %p60, %p61
    %s63 = ssub.s32 %s8, %s15
    %p64 = scmp.eq.s32.totalorder %s63, 0
    %s66 = sadd.s32 %s65, 1
    %s67 = scalar_select %p64, %s65, %s66
    %p70 = pneg %p64
    %p71 = scmp.eq.s32.totalorder %s8, 1
    %p72 = por %p70, %p71
    %p73 = scmp.ne.s32.totalorder %s65, %s68
    %p74 = scmp.eq.s32.totalorder %s8, 0
    %p75 = por %p73, %p74
    %p76 = scmp.ne.s32.totalorder %s65, %s68
    %p77 = scmp.eq.s32.totalorder %s13, 1
    %p78 = por %p76, %p77
    %p79 = scmp.ne.s32.totalorder %s68, %s69
    %p80 = scmp.eq.s32.totalorder %s13, 0
    %p81 = por %p79, %p80
    %p82 = scmp.ne.s32.totalorder %s68, %s69
    %p83 = scmp.eq.s32.totalorder %s14, 1
    %p84 = por %p82, %p83
    %p86 = scmp.ne.s32.totalorder %s69, %s85
    %p87 = scmp.eq.s32.totalorder %s14, 0
    %p88 = por %p86, %p87
    %p89 = scmp.le.s32.totalorder 1, %s8
    %p90 = scmp.lt.s32.totalorder %s8, 3
    %p91 = pnand %p89, %p90
    %p92 = pneg %p91
    // Predicated region
    $region9: #{primary_caps_forward.1} parent=5 // pred_check
      _
    $region10: #{primary_caps_forward.1} parent=5 // pred_check_branch
      %94 = sbr.rel (%p91) target = $region12
    $region11: #{primary_caps_forward.1} parent=5 // pred_region
      %s95 = ssub.s32 %s8, 1
      // Predicated region
      $region13: #{primary_caps_forward.1} parent=11 // pred_check
        %p96 = pneg %p55
      $region14: #{primary_caps_forward.1} parent=11 // pred_check_branch
        %98 = sbr.rel (%p96) target = $region16
      $region15: #{primary_caps_forward.1} parent=11 // pred_region
        _
      $region16: #{primary_caps_forward.1} parent=11 // pred_fallthru
        _
    $region12: #{primary_caps_forward.1} parent=5 // pred_fallthru
      _
    %p99 = scmp.lt.s32.totalorder %s8, 2
    // Predicated region
    $region17: #{primary_caps_forward.1} parent=5 // pred_check
      %p100 = pneg %p99
    $region18: #{primary_caps_forward.1} parent=5 // pred_check_branch
      %102 = sbr.rel (%p100) target = $region20
    $region19: #{primary_caps_forward.1} parent=5 // pred_region
      // Predicated region
      $region21: #{primary_caps_forward.1} parent=19 // pred_check
        %p103 = pneg %p28
      $region22: #{primary_caps_forward.1} parent=19 // pred_check_branch
        %105 = sbr.rel (%p103) target = $region24
      $region23: #{primary_caps_forward.1} parent=19 // pred_region
        %p106 = scmp.lt.s32.totalorder %s8, 1
        %s107 = scalar_select %p106, %s8, 1
        %s108 = smul.addr %s107, 48
        %s109 = smul.addr %s108, 4
        %s110 = scalar_lea.vmem %s0, %s109
      $region24: #{primary_caps_forward.1} parent=19 // pred_fallthru
        _
    $region20: #{primary_caps_forward.1} parent=5 // pred_fallthru
      _
    %p111 = scmp.le.s32.totalorder 1, %s8
    %p112 = scmp.lt.s32.totalorder %s8, 3
    %p113 = pnand %p111, %p112
    %p114 = pneg %p113
    // Predicated region
    $region25: #{primary_caps_forward.1} parent=5 // pred_check
      _
    $region26: #{primary_caps_forward.1} parent=5 // pred_check_branch
      %116 = sbr.rel (%p113) target = $region28
    $region27: #{primary_caps_forward.1} parent=5 // pred_region
      %s117 = ssub.s32 %s8, 1
      %p118 = scmp.lt.s32.totalorder %s13, 1
      %s119 = scalar_select %p118, %s13, 1
      %s120 = smul.addr %s119, 48
      %s121 = smul.addr %s120, 4
      %s122 = scalar_lea.vmem %s0, %s121
      %p123 = pneg %p34
      %p124 = pneg %p31
      %p125 = pneg %p55
      %p126 = pneg %p52
      %p127 = pneg %p81
      %p128 = pneg %p78
      %p129 = scmp.lt.s32.totalorder %s13, 1
      %s130 = scalar_select %p129, %s13, 1
      %s131 = smul.addr %s130, 2
      %s132 = smul.addr %s131, 4
      %s133 = scalar_lea.vmem %s2, %s132
      %p134 = scmp.lt.s32.totalorder %s13, 1
      %s135 = scalar_select %p134, %s13, 1
      %s136 = smul.addr %s135, 48
      %s137 = smul.addr %s136, 4
      %s138 = scalar_lea.vmem %s0, %s137
      %p139 = scmp.lt.s32.totalorder %s13, 1
      %s140 = scalar_select %p139, %s13, 1
      %s141 = smul.addr %s140, 2
      %s142 = smul.addr %s141, 4
      %s143 = scalar_lea.vmem %s2, %s142
      %v145 = vld [vmem:[%s138] sm:$0xff]
      %v146 = vld [vmem:[%s138 + $0x8] sm:$0xff]
      %v147 = vld [vmem:[%s138 + $0x10] sm:$0xff]
      %v148 = vld [vmem:[%s138 + $0x18] sm:$0xff]
      %v149 = vld [vmem:[%s138 + $0x20] sm:$0xff]
      %v150 = vld [vmem:[%s138 + $0x28] sm:$0xff]
      %v151 = vld [vmem:[%s138 + $0x30] sm:$0xff]
      %v152 = vld [vmem:[%s138 + $0x38] sm:$0xff]
      %v153 = vld [vmem:[%s138 + $0x40] sm:$0xff]
      %v154 = vld [vmem:[%s138 + $0x48] sm:$0xff]
      %v155 = vld [vmem:[%s138 + $0x50] sm:$0xff]
      %v156 = vld [vmem:[%s138 + $0x58] sm:$0xff]
      %v157 = vld [vmem:[%s138 + $0x60] sm:$0xff]
      %v158 = vld [vmem:[%s138 + $0x68] sm:$0xff]
      %v159 = vld [vmem:[%s138 + $0x70] sm:$0xff]
      %v160 = vld [vmem:[%s138 + $0x78] sm:$0xff]
      %v161 = vld [vmem:[%s138 + $0x80] sm:$0xff]
      %v162 = vld [vmem:[%s138 + $0x88] sm:$0xff]
      %v163 = vld [vmem:[%s138 + $0x90] sm:$0xff]
      %v164 = vld [vmem:[%s138 + $0x98] sm:$0xff]
      %v165 = vld [vmem:[%s138 + $0xa0] sm:$0xff]
      %v166 = vld [vmem:[%s138 + $0xa8] sm:$0xff]
      %v167 = vld [vmem:[%s138 + $0xb0] sm:$0xff]
      %v168 = vld [vmem:[%s138 + $0xb8] sm:$0xff]
      %v169 = vld [vmem:[%s1] sm:$0xff]
      %v170 = vld [vmem:[%s1 + $0x8] sm:$0xf]
      %v171 = vld [vmem:[%s1 + $0xc] sm:$0xff]
      %v172 = vld [vmem:[%s1 + $0x14] sm:$0xf]
      %v175 = vcombine.high %v169, %v169
      %v177 = vunpack.c.l.s4 1983009808
      %v178 = vunpack.c.0.s8 %v177
      %v179 = vlaneseq
      %v180 = vshrl.u32 %v179, 7
      %v181 = vsub.s32 %v178, %v180
      %v182 = vrot.slane %v169, %v181
      %v184 = vunpack.c.l.s4 1983009808
      %v185 = vunpack.c.0.s8 %v184
      %v186 = vlaneseq
      %v187 = vshrl.u32 %v186, 7
      %v188 = vsub.s32 %v185, %v187
      %v189 = vrot.slane %v175, %v188
      %v190 = vcombine.high %v182, %v182
      %v191 = vcombine.high %v189, %v189
      %v193 = vunpack.c.l.s4 1983009808
      %v194 = vunpack.c.0.s8 %v193
      %v195 = vlaneseq
      %v196 = vshrl.u32 %v195, 7
      %v197 = vsub.s32 %v194, %v196
      %v198 = vrot.slane %v170, %v197
      %v199 = vcombine.high %v198, %v198
      %v217 = vunpack.c.l.b16 %v145
      %v218 = vunpack.c.h.b16 %v145
      %v219 = vunpack.c.l.b16 %v146
      %v220 = vunpack.c.h.b16 %v146
      %v221 = vunpack.c.l.b16 %v147
      %v222 = vunpack.c.h.b16 %v147
      %v223 = vunpack.c.l.b16 %v148
      %v224 = vunpack.c.h.b16 %v148
      %v225 = vunpack.c.l.b16 %v149
      %v226 = vunpack.c.h.b16 %v149
      %v227 = vunpack.c.l.b16 %v150
      %v228 = vunpack.c.h.b16 %v150
      %v229 = vunpack.c.l.b16 %v151
      %v230 = vunpack.c.h.b16 %v151
      %v231 = vunpack.c.l.b16 %v152
      %v232 = vunpack.c.h.b16 %v152
      %v233 = vunpack.c.l.b16 %v153
      %v234 = vunpack.c.h.b16 %v153
      %v235 = vunpack.c.l.b16 %v154
      %v236 = vunpack.c.h.b16 %v154
      %v237 = vunpack.c.l.b16 %v155
      %v238 = vunpack.c.h.b16 %v155
      %v239 = vunpack.c.l.b16 %v156
      %v240 = vunpack.c.h.b16 %v156
      %v241 = vpack.c.b16 %v223, %v217
      %v242 = vpack.c.b16 %v224, %v218
      %v243 = vpack.c.b16 %v225, %v219
      %v244 = vpack.c.b16 %v226, %v220
      %v245 = vpack.c.b16 %v227, %v221
      %v246 = vpack.c.b16 %v228, %v222
      %v247 = vpack.c.b16 %v235, %v229
      %v248 = vpack.c.b16 %v236, %v230
      %v249 = vpack.c.b16 %v237, %v231
      %v250 = vpack.c.b16 %v238, %v232
      %v251 = vpack.c.b16 %v239, %v233
      %v252 = vpack.c.b16 %v240, %v234
      %vm263 = vcmask 64512
      %v265 = vsel %vm263, %v199, 0
      %v268 = vsel %vm263, %v246, 0
      %v271 = vsel %vm263, %v252, 0
      %273 = vmatprep.subr.bf16.mxu0 %v242
      %274 = vmatpush1.bf16.xpose.msra.mxu0 %v241
      %275 = vmatprep.subr.bf16.mxu0 %v248
      %276 = vmatpush1.bf16.xpose.msra.mxu0 %v247
      %277 = vmatprep.subr.bf16.mxu0 0
      %278 = vmatpush1.bf16.xpose.msra.mxu0 0
      %279 = vmatprep.subr.bf16.mxu0 0
      %280 = vmatpush1.bf16.xpose.msra.mxu0 0
      %281 = vmatprep.subr.bf16.mxu0 0
      %282 = vmatpush1.bf16.xpose.msra.mxu0 0
      %283 = vmatprep.subr.bf16.mxu0 0
      %284 = vmatpush1.bf16.xpose.msra.mxu0 0
      %285 = vmatprep.subr.bf16.mxu0 0
      %286 = vmatpush1.bf16.xpose.msra.mxu0 0
      %287 = vmatprep.subr.bf16.mxu0 0
      %288 = vmatpush1.bf16.xpose.msra.mxu0 0
      %289 = vmatprep.subr.bf16.mxu0 0
      %290 = vmatpush1.bf16.xpose.msra.mxu0 0
      %291 = vmatprep.subr.bf16.mxu0 0
      %292 = vmatpush1.bf16.xpose.msra.mxu0 0
      %293 = vmatprep.subr.bf16.mxu0 0
      %294 = vmatpush1.bf16.xpose.msra.mxu0 0
      %295 = vmatprep.subr.bf16.mxu0 0
      %296 = vmatpush1.bf16.xpose.msra.mxu0 0
      %297 = vmatprep.subr.bf16.mxu0 0
      %298 = vmatpush1.bf16.xpose.msra.mxu0 0
      %299 = vmatprep.subr.bf16.mxu0 0
      %300 = vmatpush1.bf16.xpose.msra.mxu0 0
      %301 = vmatprep.subr.bf16.mxu0 0
      %302 = vmatpush1.bf16.xpose.msra.mxu0 0
      %303 = vmatprep.subr.bf16.mxu0 0
      %304 = vmatpush1.bf16.xpose.msra.mxu0 0
      %305 = vmatprep.mubr.bf16.mxu0 %v190
      %306 = vmatmul.mubr.bf16.gmra.mrb[0].mxu0 %v182
      %v307 = vpop.f32.mrb[0].mxu0
      %v308 = vadd.f32 0.0, %v307
      %v309 = vpop.f32.mrb[0].mxu0
      %v310 = vpop.f32.mrb[0].mxu0
      %v311 = vpop.f32.mrb[0].mxu0
      %312 = vdwg.mxu0
      %313 = vmatprep.subr.bf16.mxu0 %v244
      %314 = vmatpush1.bf16.xpose.msra.mxu0 %v243
      %315 = vmatprep.subr.bf16.mxu0 %v250
      %316 = vmatpush1.bf16.xpose.msra.mxu0 %v249
      %317 = vmatprep.subr.bf16.mxu0 0
      %318 = vmatpush1.bf16.xpose.msra.mxu0 0
      %319 = vmatprep.subr.bf16.mxu0 0
      %320 = vmatpush1.bf16.xpose.msra.mxu0 0
      %321 = vmatprep.subr.bf16.mxu0 0
      %322 = vmatpush1.bf16.xpose.msra.mxu0 0
      %323 = vmatprep.subr.bf16.mxu0 0
      %324 = vmatpush1.bf16.xpose.msra.mxu0 0
      %325 = vmatprep.subr.bf16.mxu0 0
      %326 = vmatpush1.bf16.xpose.msra.mxu0 0
      %327 = vmatprep.subr.bf16.mxu0 0
      %328 = vmatpush1.bf16.xpose.msra.mxu0 0
      %329 = vmatprep.subr.bf16.mxu0 0
      %330 = vmatpush1.bf16.xpose.msra.mxu0 0
      %331 = vmatprep.subr.bf16.mxu0 0
      %332 = vmatpush1.bf16.xpose.msra.mxu0 0
      %333 = vmatprep.subr.bf16.mxu0 0
      %334 = vmatpush1.bf16.xpose.msra.mxu0 0
      %335 = vmatprep.subr.bf16.mxu0 0
      %336 = vmatpush1.bf16.xpose.msra.mxu0 0
      %337 = vmatprep.subr.bf16.mxu0 0
      %338 = vmatpush1.bf16.xpose.msra.mxu0 0
      %339 = vmatprep.subr.bf16.mxu0 0
      %340 = vmatpush1.bf16.xpose.msra.mxu0 0
      %341 = vmatprep.subr.bf16.mxu0 0
      %342 = vmatpush1.bf16.xpose.msra.mxu0 0
      %343 = vmatprep.subr.bf16.mxu0 0
      %344 = vmatpush1.bf16.xpose.msra.mxu0 0
      %345 = vmatprep.mubr.bf16.mxu0 %v191
      %346 = vmatmul.mubr.bf16.gmra.mrb[0].mxu0 %v189
      %v347 = vpop.f32.mrb[0].mxu0
      %v348 = vadd.f32 %v308, %v347
      %v349 = vpop.f32.mrb[0].mxu0
      %v350 = vpop.f32.mrb[0].mxu0
      %v351 = vpop.f32.mrb[0].mxu0
      %352 = vdwg.mxu0
      %353 = vmatprep.subr.bf16.mxu0 %v268
      %354 = vmatpush1.bf16.xpose.msra.mxu0 %v245
      %355 = vmatprep.subr.bf16.mxu0 %v271
      %356 = vmatpush1.bf16.xpose.msra.mxu0 %v251
      %357 = vmatprep.subr.bf16.mxu0 0
      %358 = vmatpush1.bf16.xpose.msra.mxu0 0
      %359 = vmatprep.subr.bf16.mxu0 0
      %360 = vmatpush1.bf16.xpose.msra.mxu0 0
      %361 = vmatprep.subr.bf16.mxu0 0
      %362 = vmatpush1.bf16.xpose.msra.mxu0 0
      %363 = vmatprep.subr.bf16.mxu0 0
      %364 = vmatpush1.bf16.xpose.msra.mxu0 0
      %365 = vmatprep.subr.bf16.mxu0 0
      %366 = vmatpush1.bf16.xpose.msra.mxu0 0
      %367 = vmatprep.subr.bf16.mxu0 0
      %368 = vmatpush1.bf16.xpose.msra.mxu0 0
      %369 = vmatprep.subr.bf16.mxu0 0
      %370 = vmatpush1.bf16.xpose.msra.mxu0 0
      %371 = vmatprep.subr.bf16.mxu0 0
      %372 = vmatpush1.bf16.xpose.msra.mxu0 0
      %373 = vmatprep.subr.bf16.mxu0 0
      %374 = vmatpush1.bf16.xpose.msra.mxu0 0
      %375 = vmatprep.subr.bf16.mxu0 0
      %376 = vmatpush1.bf16.xpose.msra.mxu0 0
      %377 = vmatprep.subr.bf16.mxu0 0
      %378 = vmatpush1.bf16.xpose.msra.mxu0 0
      %379 = vmatprep.subr.bf16.mxu0 0
      %380 = vmatpush1.bf16.xpose.msra.mxu0 0
      %381 = vmatprep.subr.bf16.mxu0 0
      %382 = vmatpush1.bf16.xpose.msra.mxu0 0
      %383 = vmatprep.subr.bf16.mxu0 0
      %384 = vmatpush1.bf16.xpose.msra.mxu0 0
      %385 = vmatprep.mubr.bf16.mxu0 %v265
      %386 = vmatmul.mubr.bf16.gmra.mrb[0].mxu0 %v198
      %v387 = vpop.f32.mrb[0].mxu0
      %v388 = vadd.f32 %v348, %v387
      %v389 = vpop.f32.mrb[0].mxu0
      %v390 = vpop.f32.mrb[0].mxu0
      %v391 = vpop.f32.mrb[0].mxu0
      %392 = vdwg.mxu0
      %v395 = vcombine.high %v171, %v171
      %v397 = vunpack.c.l.s4 1983009808
      %v398 = vunpack.c.0.s8 %v397
      %v399 = vlaneseq
      %v400 = vshrl.u32 %v399, 7
      %v401 = vsub.s32 %v398, %v400
      %v402 = vrot.slane %v171, %v401
      %v404 = vunpack.c.l.s4 1983009808
      %v405 = vunpack.c.0.s8 %v404
      %v406 = vlaneseq
      %v407 = vshrl.u32 %v406, 7
      %v408 = vsub.s32 %v405, %v407
      %v409 = vrot.slane %v395, %v408
      %v410 = vcombine.high %v402, %v402
      %v411 = vcombine.high %v409, %v409
      %v413 = vunpack.c.l.s4 1983009808
      %v414 = vunpack.c.0.s8 %v413
      %v415 = vlaneseq
      %v416 = vshrl.u32 %v415, 7
      %v417 = vsub.s32 %v414, %v416
      %v418 = vrot.slane %v172, %v417
      %v419 = vcombine.high %v418, %v418
      %v437 = vunpack.c.l.b16 %v157
      %v438 = vunpack.c.h.b16 %v157
      %v439 = vunpack.c.l.b16 %v158
      %v440 = vunpack.c.h.b16 %v158
      %v441 = vunpack.c.l.b16 %v159
      %v442 = vunpack.c.h.b16 %v159
      %v443 = vunpack.c.l.b16 %v160
      %v444 = vunpack.c.h.b16 %v160
      %v445 = vunpack.c.l.b16 %v161
      %v446 = vunpack.c.h.b16 %v161
      %v447 = vunpack.c.l.b16 %v162
      %v448 = vunpack.c.h.b16 %v162
      %v449 = vunpack.c.l.b16 %v163
      %v450 = vunpack.c.h.b16 %v163
      %v451 = vunpack.c.l.b16 %v164
      %v452 = vunpack.c.h.b16 %v164
      %v453 = vunpack.c.l.b16 %v165
      %v454 = vunpack.c.h.b16 %v165
      %v455 = vunpack.c.l.b16 %v166
      %v456 = vunpack.c.h.b16 %v166
      %v457 = vunpack.c.l.b16 %v167
      %v458 = vunpack.c.h.b16 %v167
      %v459 = vunpack.c.l.b16 %v168
      %v460 = vunpack.c.h.b16 %v168
      %v461 = vpack.c.b16 %v443, %v437
      %v462 = vpack.c.b16 %v444, %v438
      %v463 = vpack.c.b16 %v445, %v439
      %v464 = vpack.c.b16 %v446, %v440
      %v465 = vpack.c.b16 %v447, %v441
      %v466 = vpack.c.b16 %v448, %v442
      %v467 = vpack.c.b16 %v455, %v449
      %v468 = vpack.c.b16 %v456, %v450
      %v469 = vpack.c.b16 %v457, %v451
      %v470 = vpack.c.b16 %v458, %v452
      %v471 = vpack.c.b16 %v459, %v453
      %v472 = vpack.c.b16 %v460, %v454
      %v484 = vsel %vm263, %v419, 0
      %v487 = vsel %vm263, %v466, 0
      %v490 = vsel %vm263, %v472, 0
      %492 = vmatprep.subr.bf16.mxu0 %v462
      %493 = vmatpush1.bf16.xpose.msra.mxu0 %v461
      %494 = vmatprep.subr.bf16.mxu0 %v468
      %495 = vmatpush1.bf16.xpose.msra.mxu0 %v467
      %496 = vmatprep.subr.bf16.mxu0 0
      %497 = vmatpush1.bf16.xpose.msra.mxu0 0
      %498 = vmatprep.subr.bf16.mxu0 0
      %499 = vmatpush1.bf16.xpose.msra.mxu0 0
      %500 = vmatprep.subr.bf16.mxu0 0
      %501 = vmatpush1.bf16.xpose.msra.mxu0 0
      %502 = vmatprep.subr.bf16.mxu0 0
      %503 = vmatpush1.bf16.xpose.msra.mxu0 0
      %504 = vmatprep.subr.bf16.mxu0 0
      %505 = vmatpush1.bf16.xpose.msra.mxu0 0
      %506 = vmatprep.subr.bf16.mxu0 0
      %507 = vmatpush1.bf16.xpose.msra.mxu0 0
      %508 = vmatprep.subr.bf16.mxu0 0
      %509 = vmatpush1.bf16.xpose.msra.mxu0 0
      %510 = vmatprep.subr.bf16.mxu0 0
      %511 = vmatpush1.bf16.xpose.msra.mxu0 0
      %512 = vmatprep.subr.bf16.mxu0 0
      %513 = vmatpush1.bf16.xpose.msra.mxu0 0
      %514 = vmatprep.subr.bf16.mxu0 0
      %515 = vmatpush1.bf16.xpose.msra.mxu0 0
      %516 = vmatprep.subr.bf16.mxu0 0
      %517 = vmatpush1.bf16.xpose.msra.mxu0 0
      %518 = vmatprep.subr.bf16.mxu0 0
      %519 = vmatpush1.bf16.xpose.msra.mxu0 0
      %520 = vmatprep.subr.bf16.mxu0 0
      %521 = vmatpush1.bf16.xpose.msra.mxu0 0
      %522 = vmatprep.subr.bf16.mxu0 0
      %523 = vmatpush1.bf16.xpose.msra.mxu0 0
      %524 = vmatprep.mubr.bf16.mxu0 %v410
      %525 = vmatmul.mubr.bf16.gmra.mrb[0].mxu0 %v402
      %v526 = vpop.f32.mrb[0].mxu0
      %v527 = vadd.f32 0.0, %v526
      %v528 = vpop.f32.mrb[0].mxu0
      %v529 = vpop.f32.mrb[0].mxu0
      %v530 = vpop.f32.mrb[0].mxu0
      %531 = vdwg.mxu0
      %532 = vmatprep.subr.bf16.mxu0 %v464
      %533 = vmatpush1.bf16.xpose.msra.mxu0 %v463
      %534 = vmatprep.subr.bf16.mxu0 %v470
      %535 = vmatpush1.bf16.xpose.msra.mxu0 %v469
      %536 = vmatprep.subr.bf16.mxu0 0
      %537 = vmatpush1.bf16.xpose.msra.mxu0 0
      %538 = vmatprep.subr.bf16.mxu0 0
      %539 = vmatpush1.bf16.xpose.msra.mxu0 0
      %540 = vmatprep.subr.bf16.mxu0 0
      %541 = vmatpush1.bf16.xpose.msra.mxu0 0
      %542 = vmatprep.subr.bf16.mxu0 0
      %543 = vmatpush1.bf16.xpose.msra.mxu0 0
      %544 = vmatprep.subr.bf16.mxu0 0
      %545 = vmatpush1.bf16.xpose.msra.mxu0 0
      %546 = vmatprep.subr.bf16.mxu0 0
      %547 = vmatpush1.bf16.xpose.msra.mxu0 0
      %548 = vmatprep.subr.bf16.mxu0 0
      %549 = vmatpush1.bf16.xpose.msra.mxu0 0
      %550 = vmatprep.subr.bf16.mxu0 0
      %551 = vmatpush1.bf16.xpose.msra.mxu0 0
      %552 = vmatprep.subr.bf16.mxu0 0
      %553 = vmatpush1.bf16.xpose.msra.mxu0 0
      %554 = vmatprep.subr.bf16.mxu0 0
      %555 = vmatpush1.bf16.xpose.msra.mxu0 0
      %556 = vmatprep.subr.bf16.mxu0 0
      %557 = vmatpush1.bf16.xpose.msra.mxu0 0
      %558 = vmatprep.subr.bf16.mxu0 0
      %559 = vmatpush1.bf16.xpose.msra.mxu0 0
      %560 = vmatprep.subr.bf16.mxu0 0
      %561 = vmatpush1.bf16.xpose.msra.mxu0 0
      %562 = vmatprep.subr.bf16.mxu0 0
      %563 = vmatpush1.bf16.xpose.msra.mxu0 0
      %564 = vmatprep.mubr.bf16.mxu0 %v411
      %565 = vmatmul.mubr.bf16.gmra.mrb[0].mxu0 %v409
      %v566 = vpop.f32.mrb[0].mxu0
      %v567 = vadd.f32 %v527, %v566
      %v568 = vpop.f32.mrb[0].mxu0
      %v569 = vpop.f32.mrb[0].mxu0
      %v570 = vpop.f32.mrb[0].mxu0
      %571 = vdwg.mxu0
      %572 = vmatprep.subr.bf16.mxu0 %v487
      %573 = vmatpush1.bf16.xpose.msra.mxu0 %v465
      %574 = vmatprep.subr.bf16.mxu0 %v490
      %575 = vmatpush1.bf16.xpose.msra.mxu0 %v471
      %576 = vmatprep.subr.bf16.mxu0 0
      %577 = vmatpush1.bf16.xpose.msra.mxu0 0
      %578 = vmatprep.subr.bf16.mxu0 0
      %579 = vmatpush1.bf16.xpose.msra.mxu0 0
      %580 = vmatprep.subr.bf16.mxu0 0
      %581 = vmatpush1.bf16.xpose.msra.mxu0 0
      %582 = vmatprep.subr.bf16.mxu0 0
      %583 = vmatpush1.bf16.xpose.msra.mxu0 0
      %584 = vmatprep.subr.bf16.mxu0 0
      %585 = vmatpush1.bf16.xpose.msra.mxu0 0
      %586 = vmatprep.subr.bf16.mxu0 0
      %587 = vmatpush1.bf16.xpose.msra.mxu0 0
      %588 = vmatprep.subr.bf16.mxu0 0
      %589 = vmatpush1.bf16.xpose.msra.mxu0 0
      %590 = vmatprep.subr.bf16.mxu0 0
      %591 = vmatpush1.bf16.xpose.msra.mxu0 0
      %592 = vmatprep.subr.bf16.mxu0 0
      %593 = vmatpush1.bf16.xpose.msra.mxu0 0
      %594 = vmatprep.subr.bf16.mxu0 0
      %595 = vmatpush1.bf16.xpose.msra.mxu0 0
      %596 = vmatprep.subr.bf16.mxu0 0
      %597 = vmatpush1.bf16.xpose.msra.mxu0 0
      %598 = vmatprep.subr.bf16.mxu0 0
      %599 = vmatpush1.bf16.xpose.msra.mxu0 0
      %600 = vmatprep.subr.bf16.mxu0 0
      %601 = vmatpush1.bf16.xpose.msra.mxu0 0
      %602 = vmatprep.subr.bf16.mxu0 0
      %603 = vmatpush1.bf16.xpose.msra.mxu0 0
      %604 = vmatprep.mubr.bf16.mxu0 %v484
      %605 = vmatmul.mubr.bf16.gmra.mrb[0].mxu0 %v418
      %v606 = vpop.f32.mrb[0].mxu0
      %v607 = vadd.f32 %v567, %v606
      %v608 = vpop.f32.mrb[0].mxu0
      %v609 = vpop.f32.mrb[0].mxu0
      %v610 = vpop.f32.mrb[0].mxu0
      %611 = vdwg.mxu0
      %v612 = vmul.f32 %v388, %v388
      %v613 = vmul.f32 %v607, %v607
      %vm614 = vcmask 257024
      %v615 = vsel %vm614, %v612, 0.0
      %v616 = vsel %vm614, %v613, 0.0
      %v617 = vadd.f32 %v615, %v616
      %v618 = vlaneseq
      %v619 = vshrl.u32 %v618, 7
      %v620 = vadd.s32 %v619, 8
      %v621 = vadd.s32 %v619, 16
      %v622 = vadd.s32 %v619, 24
      %v623 = vlaneseq
      %v624 = vand.u32 %v623, 127
      %v625 = vmul.u32 %v624, 16
      %vm626 = vcmp.ge.s32.totalorder %v619, %v625
      %vm627 = vcmp.ge.s32.totalorder %v620, %v625
      %vm628 = vcmp.ge.s32.totalorder %v621, %v625
      %vm629 = vcmp.ge.s32.totalorder %v622, %v625
      %v630 = vadd.s32 %v624, 1
      %v631 = vmul.u32 %v630, 16
      %vm632 = vcmp.lt.s32.totalorder %v619, %v631
      %vm633 = vcmp.lt.s32.totalorder %v620, %v631
      %vm634 = vcmp.lt.s32.totalorder %v621, %v631
      %vm635 = vcmp.lt.s32.totalorder %v622, %v631
      %vm636 = vmand %vm626, %vm632
      %vm637 = vmand %vm627, %vm633
      %vm638 = vmand %vm628, %vm634
      %vm639 = vmand %vm629, %vm635
      %v640 = vsel %vm636, 1, 0
      %v641 = vsel %vm637, 1, 0
      %v642 = vsel %vm638, 1, 0
      %v643 = vsel %vm639, 1, 0
      %v644 = vcvt.s32.f32 %v640
      %v645 = vcvt.s32.f32 %v641
      %v646 = vcvt.s32.f32 %v642
      %v647 = vcvt.s32.f32 %v643
      %v648 = vmul.u32 %v619, 16
      %vm649 = vcmp.ge.s32.totalorder %v624, %v648
      %v650 = vadd.s32 %v619, 1
      %v651 = vmul.u32 %v650, 16
      %vm652 = vcmp.lt.s32.totalorder %v624, %v651
      %vm653 = vmand %vm649, %vm652
      %v654 = vsel %vm653, 1, 0
      %v655 = vcvt.s32.f32 %v654
      %vm656 = vcmask 261120
      %v658 = vsel %vm656, %v617, 0
      %660 = vmatprep.subr.mxu0 0.0
      %661 = vmatpush1.msra.mxu0 %v644
      %662 = vmatprep.subr.mxu0 0.0
      %663 = vmatpush1.msra.mxu0 %v645
      %664 = vmatprep.subr.mxu0 0.0
      %665 = vmatpush1.msra.mxu0 %v646
      %666 = vmatprep.subr.mxu0 0.0
      %667 = vmatpush1.msra.mxu0 %v647
      %668 = vmatprep.subr.mxu0 0.0
      %669 = vmatpush1.msra.mxu0 0.0
      %670 = vmatprep.subr.mxu0 0.0
      %671 = vmatpush1.msra.mxu0 0.0
      %672 = vmatprep.subr.mxu0 0.0
      %673 = vmatpush1.msra.mxu0 0.0
      %674 = vmatprep.subr.mxu0 0.0
      %675 = vmatpush1.msra.mxu0 0.0
      %676 = vmatprep.subr.mxu0 0.0
      %677 = vmatpush1.msra.mxu0 0.0
      %678 = vmatprep.subr.mxu0 0.0
      %679 = vmatpush1.msra.mxu0 0.0
      %680 = vmatprep.subr.mxu0 0.0
      %681 = vmatpush1.msra.mxu0 0.0
      %682 = vmatprep.subr.mxu0 0.0
      %683 = vmatpush1.msra.mxu0 0.0
      %684 = vmatprep.subr.mxu0 0.0
      %685 = vmatpush1.msra.mxu0 0.0
      %686 = vmatprep.subr.mxu0 0.0
      %687 = vmatpush1.msra.mxu0 0.0
      %688 = vmatprep.subr.mxu0 0.0
      %689 = vmatpush1.msra.mxu0 0.0
      %690 = vmatprep.subr.mxu0 0.0
      %691 = vmatpush1.msra.mxu0 0.0
      %692 = vmatprep.subr.mxu0 0.0
      %693 = vmatpush1.msra.mxu0 0.0
      %694 = vmatprep.subr.mxu0 0.0
      %695 = vmatpush1.msra.mxu0 0.0
      %696 = vmatprep.subr.mxu0 0.0
      %697 = vmatpush1.msra.mxu0 0.0
      %698 = vmatprep.subr.mxu0 0.0
      %699 = vmatpush1.msra.mxu0 0.0
      %700 = vmatprep.subr.mxu0 0.0
      %701 = vmatpush1.msra.mxu0 0.0
      %702 = vmatprep.subr.mxu0 0.0
      %703 = vmatpush1.msra.mxu0 0.0
      %704 = vmatprep.subr.mxu0 0.0
      %705 = vmatpush1.msra.mxu0 0.0
      %706 = vmatprep.subr.mxu0 0.0
      %707 = vmatpush1.msra.mxu0 0.0
      %708 = vmatprep.subr.mxu0 0.0
      %709 = vmatpush1.msra.mxu0 0.0
      %710 = vmatprep.subr.mxu0 0.0
      %711 = vmatpush1.msra.mxu0 0.0
      %712 = vmatprep.subr.mxu0 0.0
      %713 = vmatpush1.msra.mxu0 0.0
      %714 = vmatprep.subr.mxu0 0.0
      %715 = vmatpush1.msra.mxu0 0.0
      %716 = vmatprep.subr.mxu0 0.0
      %717 = vmatpush1.msra.mxu0 0.0
      %718 = vmatprep.subr.mxu0 0.0
      %719 = vmatpush1.msra.mxu0 0.0
      %720 = vmatprep.subr.mxu0 0.0
      %721 = vmatpush1.msra.mxu0 0.0
      %722 = vmatprep.subr.mxu0 0.0
      %723 = vmatpush1.msra.mxu0 0.0
      %724 = vmatprep.mubr.f32.mxu0 0.0
      %725 = vmatmul.mubr.f32.gmra.mrb[0].mxu0 %v658
      %v726 = vpop.f32.mrb[0].mxu0
      %v727 = vadd.f32 0.0, %v726
      %v728 = vpop.f32.mrb[0].mxu0
      %729 = vdwg.mxu0
      %v730 = vrsqrt.pop %v727
      %v731 = vmul.f32 %v727, %v730
      %vm732 = vcmp.eq.f32.partialorder %v727, inf
      %v733 = vsel %vm732, %v727, %v731
      %vm734 = vcmp.eq.f32.partialorder %v727, 0.0
      %v735 = vand.u32 %v727, 2147483648
      %v736 = vsel %vm734, %v735, %v733
      %v737 = vadd.f32 %v727, 1.0
      %v738 = vrcp.pop %v737
      %v739 = vmul.f32 %v736, %v738
      %vm740 = vcmask 15360
      %v742 = vsel %vm740, %v739, 0
      %vm744 = vcmask 1041408
      %v746 = vsel %vm744, %v655, 0
      %748 = vmatprep.subr.mxu0 0.0
      %749 = vmatpush1.msra.mxu0 %v746
      %750 = vmatprep.subr.mxu0 0.0
      %751 = vmatpush1.msra.mxu0 0.0
      %752 = vmatprep.subr.mxu0 0.0
      %753 = vmatpush1.msra.mxu0 0.0
      %754 = vmatprep.subr.mxu0 0.0
      %755 = vmatpush1.msra.mxu0 0.0
      %756 = vmatprep.subr.mxu0 0.0
      %757 = vmatpush1.msra.mxu0 0.0
      %758 = vmatprep.subr.mxu0 0.0
      %759 = vmatpush1.msra.mxu0 0.0
      %760 = vmatprep.subr.mxu0 0.0
      %761 = vmatpush1.msra.mxu0 0.0
      %762 = vmatprep.subr.mxu0 0.0
      %763 = vmatpush1.msra.mxu0 0.0
      %764 = vmatprep.subr.mxu0 0.0
      %765 = vmatpush1.msra.mxu0 0.0
      %766 = vmatprep.subr.mxu0 0.0
      %767 = vmatpush1.msra.mxu0 0.0
      %768 = vmatprep.subr.mxu0 0.0
      %769 = vmatpush1.msra.mxu0 0.0
      %770 = vmatprep.subr.mxu0 0.0
      %771 = vmatpush1.msra.mxu0 0.0
      %772 = vmatprep.subr.mxu0 0.0
      %773 = vmatpush1.msra.mxu0 0.0
      %774 = vmatprep.subr.mxu0 0.0
      %775 = vmatpush1.msra.mxu0 0.0
      %776 = vmatprep.subr.mxu0 0.0
      %777 = vmatpush1.msra.mxu0 0.0
      %778 = vmatprep.subr.mxu0 0.0
      %779 = vmatpush1.msra.mxu0 0.0
      %780 = vmatprep.subr.mxu0 0.0
      %781 = vmatpush1.msra.mxu0 0.0
      %782 = vmatprep.subr.mxu0 0.0
      %783 = vmatpush1.msra.mxu0 0.0
      %784 = vmatprep.subr.mxu0 0.0
      %785 = vmatpush1.msra.mxu0 0.0
      %786 = vmatprep.subr.mxu0 0.0
      %787 = vmatpush1.msra.mxu0 0.0
      %788 = vmatprep.subr.mxu0 0.0
      %789 = vmatpush1.msra.mxu0 0.0
      %790 = vmatprep.subr.mxu0 0.0
      %791 = vmatpush1.msra.mxu0 0.0
      %792 = vmatprep.subr.mxu0 0.0
      %793 = vmatpush1.msra.mxu0 0.0
      %794 = vmatprep.subr.mxu0 0.0
      %795 = vmatpush1.msra.mxu0 0.0
      %796 = vmatprep.subr.mxu0 0.0
      %797 = vmatpush1.msra.mxu0 0.0
      %798 = vmatprep.subr.mxu0 0.0
      %799 = vmatpush1.msra.mxu0 0.0
      %800 = vmatprep.subr.mxu0 0.0
      %801 = vmatpush1.msra.mxu0 0.0
      %802 = vmatprep.subr.mxu0 0.0
      %803 = vmatpush1.msra.mxu0 0.0
      %804 = vmatprep.subr.mxu0 0.0
      %805 = vmatpush1.msra.mxu0 0.0
      %806 = vmatprep.subr.mxu0 0.0
      %807 = vmatpush1.msra.mxu0 0.0
      %808 = vmatprep.subr.mxu0 0.0
      %809 = vmatpush1.msra.mxu0 0.0
      %810 = vmatprep.subr.mxu0 0.0
      %811 = vmatpush1.msra.mxu0 0.0
      %812 = vmatprep.mubr.f32.mxu0 0.0
      %813 = vmatmul.mubr.f32.gmra.mrb[0].mxu0 %v742
      %v814 = vpop.f32.mrb[0].mxu0
      %v815 = vadd.f32 0.0, %v814
      %v816 = vpop.f32.mrb[0].mxu0
      %817 = vdwg.mxu0
      %v818 = vmul.f32 %v388, %v815
      %v819 = vmul.f32 %v607, %v815
      %820 = vst.msk [vmem:[%s143] sm:$0xf] %vm614, %v818
      %821 = vst.msk [vmem:[%s143 + $0x4] sm:$0xf] %vm614, %v819
      %p822 = scmp.lt.s32.totalorder %s13, 1
      %s823 = scalar_select %p822, %s13, 1
      %s824 = smul.addr %s823, 2
      %s825 = smul.addr %s824, 4
      %s826 = scalar_lea.vmem %s2, %s825
      // Predicated region
      $region29: #{primary_caps_forward.1} parent=27 // pred_check
        %p827 = pneg %p78
      $region30: #{primary_caps_forward.1} parent=27 // pred_check_branch
        %829 = sbr.rel (%p827) target = $region32
      $region31: #{primary_caps_forward.1} parent=27 // pred_region
        _
      $region32: #{primary_caps_forward.1} parent=27 // pred_fallthru
        _
    $region28: #{primary_caps_forward.1} parent=5 // pred_fallthru
      _
    %p830 = scmp.le.s32.totalorder 2, %s8
    // Predicated region
    $region33: #{primary_caps_forward.1} parent=5 // pred_check
      %p831 = pneg %p830
    $region34: #{primary_caps_forward.1} parent=5 // pred_check_branch
      %833 = sbr.rel (%p831) target = $region36
    $region35: #{primary_caps_forward.1} parent=5 // pred_region
      %s834 = ssub.s32 %s8, 2
      // Predicated region
      $region37: #{primary_caps_forward.1} parent=35 // pred_check
        %p835 = pneg %p84
      $region38: #{primary_caps_forward.1} parent=35 // pred_check_branch
        %837 = sbr.rel (%p835) target = $region40
      $region39: #{primary_caps_forward.1} parent=35 // pred_region
        %p838 = scmp.lt.s32.totalorder %s14, 1
        %s839 = scalar_select %p838, %s14, 1
        %s840 = smul.addr %s839, 2
        %s841 = smul.addr %s840, 4
        %s842 = scalar_lea.vmem %s2, %s841
      $region40: #{primary_caps_forward.1} parent=35 // pred_fallthru
        _
    $region36: #{primary_caps_forward.1} parent=5 // pred_fallthru
      _
  $region6: #{primary_caps_forward.1} parent=0 // loop_footer
    %s12 = sadd.s32 1, %s8
  $region7: #{primary_caps_forward.1} parent=0 // loop_footer_branch
    %7 = sbr.rel target = $region3
  $region8: #{primary_caps_forward.1} parent=0 // loop_exit
    _

</llo_original>
